<compile_context>
chip_gen: v7x
topology: tpu7x:2x2x1
jax: 0.10.0
libtpu: 0.0.40
codegen_flags: <defaults>
</compile_context>

<pallas_src>
import jax
import jax.numpy as jnp
from jax.experimental import pallas as pl
from jax.experimental.pallas import tpu as pltpu

_LANE = 512                        # preferred lane-dense last dim (multiple of 128)
_MAX_TILE_BYTES = 2 * 1024 * 1024  # 2 MiB/tile: 2 bufs x (in+out) = 8 MiB, safe on
                                   # v5e (16 MiB scoped default), v6e (32 MiB), v7x (64 MiB VMEM)
_MIN_GRID_BLOCKS = 4               # give megacore (v7x: 2 TCs) >= 2 blocks each when possible


def _round_up(v, m):
    return ((v + m - 1) // m) * m


def _sublane_multiple(dtype):
    # Sub-32-bit dtypes pack along sublanes: 8 rows for 4B, 16 for 2B, 32 for 1B.
    itemsize = jnp.dtype(dtype).itemsize
    return {4: 8, 2: 16, 1: 32}.get(itemsize, 8)


def _fused_affine_relu_kernel(params_ref, x_ref, o_ref):
    # params_ref: SMEM f32[2] = [scale, shift]; read once per grid step.
    scale = params_ref[0]
    shift = params_ref[1]
    y = x_ref[...].astype(jnp.float32) * scale + shift
    o_ref[...] = jnp.maximum(y, 0.0).astype(o_ref.dtype)


def _pick_tile_r(rows, lane, dtype):
    sub = _sublane_multiple(dtype)
    itemsize = jnp.dtype(dtype).itemsize
    max_rows_by_bytes = max(sub, (_MAX_TILE_BYTES // (lane * itemsize)) // sub * sub)
    tile_r = min(max_rows_by_bytes, _round_up(rows, sub))
    # If everything collapsed into too few blocks but there is enough work,
    # split so both TensorCores get blocks and DMA/compute can overlap.
    if pl.cdiv(rows, tile_r) < _MIN_GRID_BLOCKS and rows >= _MIN_GRID_BLOCKS * sub:
        tile_r = _round_up(pl.cdiv(rows, _MIN_GRID_BLOCKS), sub)
    return tile_r


def _run_2d(x2, params, out_dtype):
    """Run the fused affine+relu over a lane-dense (rows, lane) view."""
    rows, lane = x2.shape
    tile_r = _pick_tile_r(rows, lane, x2.dtype)
    grid = (pl.cdiv(rows, tile_r),)   # partial edge block handled by Pallas (masked)
    itemsize = jnp.dtype(x2.dtype).itemsize
    cost = pl.CostEstimate(
        flops=2 * rows * lane,
        transcendentals=0,
        bytes_accessed=2 * rows * lane * itemsize,
    )
    return pl.pallas_call(
        _fused_affine_relu_kernel,
        out_shape=jax.ShapeDtypeStruct((rows, lane), out_dtype),
        grid=grid,
        in_specs=[
            pl.BlockSpec(memory_space=pltpu.MemorySpace.SMEM),   # scale/shift scalars
            pl.BlockSpec((tile_r, lane), lambda i: (i, 0)),      # input tile
        ],
        out_specs=pl.BlockSpec((tile_r, lane), lambda i: (i, 0)),
        compiler_params=pltpu.CompilerParams(
            dimension_semantics=("parallel",)),
        cost_estimate=cost,
    )(params, x2)


def fused_conv_bn_relu(x, conv_w, conv_b, gamma, beta, running_mean,
                       running_var, eps=1e-5):
    """Forward of M: quant(id) -> Conv2d(1,1,1) -> BN(1) eval -> ReLU -> dequant(id)."""
    N, C, H, W = x.shape
    assert C == 1, "Conv2d(1, 1, 1) expects a single input channel"

    # Accept PyTorch-shaped params: (1,1,1,1) conv weight, (1,) vectors, or 0-d.
    def scalar(p):
        return jnp.asarray(p, jnp.float32).reshape(-1)[0]

    w = scalar(conv_w)
    b = scalar(conv_b)
    g = scalar(gamma)
    bt = scalar(beta)
    mu = scalar(running_mean)
    var = scalar(running_var)

    # Fold conv(1x1, 1->1) + inference BN(1) into one affine: y = x*scale + shift
    inv_std = 1.0 / jnp.sqrt(var + jnp.float32(eps))
    scale = w * g * inv_std
    shift = (b - mu) * g * inv_std + bt
    params = jnp.stack([scale, shift]).astype(jnp.float32)

    dtype = x.dtype
    total = x.size

    if total % _LANE == 0:
        # Fast path A: pure metadata reshape, no copies in or out.
        out2 = _run_2d(x.reshape(total // _LANE, _LANE), params, dtype)
        return out2.reshape(N, C, H, W)

    if W % 128 == 0:
        # Fast path B: rows = N*C*H, lanes = W (already lane-aligned). No copies.
        out2 = _run_2d(x.reshape(N * C * H, W), params, dtype)
        return out2.reshape(N, C, H, W)

    # Fallback for awkward shapes: pad the flat view up to a lane multiple
    # (< _LANE extra elements). Costs one extra copy each way; only hit when
    # neither the total size nor W is 128-aligned.
    rows = pl.cdiv(total, _LANE)
    padded_total = rows * _LANE
    x_flat = jnp.pad(x.reshape(-1), (0, padded_total - total))
    out2 = _run_2d(x_flat.reshape(rows, _LANE), params, dtype)
    return out2.reshape(-1)[:total].reshape(N, C, H, W)


def _reference(x, conv_w, conv_b, gamma, beta, running_mean, running_var, eps):
    # Pure-JAX reference of the same module forward (conv1x1 + BN eval + relu).
    conv_w = jnp.asarray(conv_w, jnp.float32).reshape(-1)[0]
    conv_b = jnp.asarray(conv_b, jnp.float32).reshape(-1)[0]
    gamma = jnp.asarray(gamma, jnp.float32).reshape(-1)[0]
    beta = jnp.asarray(beta, jnp.float32).reshape(-1)[0]
    mu = jnp.asarray(running_mean, jnp.float32).reshape(-1)[0]
    var = jnp.asarray(running_var, jnp.float32).reshape(-1)[0]
    y = x.astype(jnp.float32) * conv_w + conv_b
    y = (y - mu) / jnp.sqrt(var + eps) * gamma + beta
    return jnp.maximum(y, 0.0).astype(x.dtype)


if __name__ == "__main__":
    key = jax.random.PRNGKey(0)

    # Deterministic synthetic parameters with the PyTorch shapes.
    conv_w = jnp.full((1, 1, 1, 1), 0.5, dtype=jnp.float32)   # Conv2d.weight
    conv_b = jnp.full((1,), 0.1, dtype=jnp.float32)           # Conv2d.bias
    gamma = jnp.full((1,), 1.2, dtype=jnp.float32)            # BN.weight
    beta = jnp.full((1,), -0.05, dtype=jnp.float32)           # BN.bias
    running_mean = jnp.full((1,), 0.02, dtype=jnp.float32)    # BN.running_mean
    running_var = jnp.full((1,), 0.9, dtype=jnp.float32)      # BN.running_var
    eps = 1e-5

    k1, k2, k3, k4 = jax.random.split(key, 4)

    def check(x, atol):
        out = jax.block_until_ready(
            fused_conv_bn_relu(x, conv_w, conv_b, gamma, beta,
                               running_mean, running_var, eps))
        ref = _reference(x, conv_w, conv_b, gamma, beta,
                         running_mean, running_var, eps)
        assert out.shape == x.shape and out.dtype == x.dtype
        assert jnp.allclose(out.astype(jnp.float32), ref.astype(jnp.float32),
                            atol=atol, rtol=atol)

    # 1) Spec-sized small input (fast path A, single partial block).
    check(jax.random.normal(k1, (2, 1, 16, 16), dtype=jnp.float32), atol=1e-5)

    # 2) Multi-block input (fast path A, real grid of 4 blocks, no padding).
    check(jax.random.normal(k2, (2, 1, 320, 512), dtype=jnp.float32), atol=1e-5)

    # 3) Awkward shape exercising the (small) pad fallback + output slice.
    check(jax.random.normal(k3, (2, 1, 17, 19), dtype=jnp.float32), atol=1e-5)

    # 4) bf16 input exercising dtype-aware sublane tiling (16-row multiple).
    check(jax.random.normal(k4, (2, 1, 32, 128), dtype=jnp.bfloat16), atol=1e-2)

    print("KERNEL_OK")
</pallas_src>

<mosaic_0001>
module attributes {stable_mosaic.version = 11 : i64} {
  func.func @_fused_affine_relu_kernel(%arg0: i32, %arg1: memref<2xf32, #tpu.memory_space<smem>>, %arg2: memref<8x512xf32, #tpu.memory_space<vmem>>, %arg3: memref<8x512xf32, #tpu.memory_space<vmem>>) attributes {dimension_semantics = [#tpu.dimension_semantics<parallel>], iteration_bounds = array<i64: 1>, scalar_prefetch = 0 : i64, scratch_operands = 0 : i64, tpu.core_type = #tpu.core_type<tc>, window_params = [{transform_indices = @transform_0, window_bounds = array<i64: 2>}, {transform_indices = @transform_1, window_bounds = array<i64: 8, 512>}, {transform_indices = @transform_2, window_bounds = array<i64: 8, 512>}]} {
    %c0 = arith.constant 0 : index
    %0 = memref.load %arg1[%c0] : memref<2xf32, #tpu.memory_space<smem>>
    %c1 = arith.constant 1 : index
    %1 = memref.load %arg1[%c1] : memref<2xf32, #tpu.memory_space<smem>>
    %c0_0 = arith.constant 0 : index
    %c0_1 = arith.constant 0 : index
    %2 = vector.load %arg2[%c0_0, %c0_1] : memref<8x512xf32, #tpu.memory_space<vmem>>, vector<8x512xf32>
    %3 = vector.broadcast %0 : f32 to vector<8x512xf32>
    %4 = arith.mulf %2, %3 : vector<8x512xf32>
    %5 = vector.broadcast %1 : f32 to vector<8x512xf32>
    %6 = arith.addf %4, %5 : vector<8x512xf32>
    %cst = arith.constant 0.000000e+00 : f32
    %7 = vector.broadcast %cst : f32 to vector<8x512xf32>
    %8 = arith.maximumf %6, %7 : vector<8x512xf32>
    %c0_2 = arith.constant 0 : index
    %c0_3 = arith.constant 0 : index
    %9 = vector.load %arg3[%c0_2, %c0_3] : memref<8x512xf32, #tpu.memory_space<vmem>>, vector<8x512xf32>
    tpu.vector_store %arg3[%c0_2, %c0_3], %8 {strides = array<i32>} : memref<8x512xf32, #tpu.memory_space<vmem>>, vector<8x512xf32>,
    return
  }
  func.func @transform_0(%arg0: i32) -> i32 {
    %c0_i32 = arith.constant 0 : i32
    %c0_i32_0 = arith.constant 0 : i32
    return %c0_i32 : i32
  }
  func.func @transform_1(%arg0: i32) -> (i32, i32) {
    %c0_i32 = arith.constant 0 : i32
    %c0_i32_0 = arith.constant 0 : i32
    return %arg0, %c0_i32 : i32, i32
  }
  func.func @transform_2(%arg0: i32) -> (i32, i32) {
    %c0_i32 = arith.constant 0 : i32
    %c0_i32_0 = arith.constant 0 : i32
    return %arg0, %c0_i32 : i32, i32
  }
}

</mosaic_0001>

<llo_original>
// kernel: tpu_custom_call.1
$region0: #{tpu_custom_call.1}
  #allocation0 [shape = 'u32[]', space=smem, size = 0x4, offset = 0x4, fixed_abs, tag = 'smem constant byte address 0x4 - core index']
  #allocation1 [shape = 'u32[144,128]{1,0:T(1,128)}', space=vmem, size = 0x12000, scoped, tag = 'internal scratch']
  %s0 = inlined_call_operand.hbm [shape: f32[2], index: 0, kind: input, shape index: {}]
  %s1 = inlined_call_operand.hbm [shape: f32[1,512], index: 1, kind: input, shape index: {}]
  %s2 = inlined_call_operand.hbm [shape: f32[1,512], index: 2, kind: output, shape index: {}]
  %s3 = sld [smem:[#allocation0]]
  $region26: #{tpu_custom_call.1} parent=0
    _
  %s5 = ssub.s32 1, %s3
  %s6 = scalar_select 0, %s5, %s3
  $region1: #{tpu_custom_call.1} parent=0
    #allocation2 [shape = 'u8[512]{0}', space=smem, size = 0x200, scoped, tag = 'input window, operand 0, single buffered']
    #allocation3 [shape = 's32[1]{0}', space=sflag, size = 0x4, scoped, tag = 'scoped memory for tpu_custom_call.1']
    #allocation4 [shape = 's32[1]{0}', space=sflag, size = 0x4, scoped, tag = 'scoped memory for tpu_custom_call.1']
    #allocation5 [shape = 's32[1]{0}', space=sflag, size = 0x4, scoped, tag = 'scoped memory for tpu_custom_call.1']
    #allocation6 [shape = 'u8[16384]{0}', space=vmem, size = 0x4000, scoped, tag = 'input window, operand 1, single buffered']
    #allocation7 [shape = 'u8[16384]{0}', space=vmem, size = 0x4000, scoped, tag = 'output window, operand 0, single buffered']
    %7 = vsyncpa [#allocation5], 0
    %8 = vsyncpa [#allocation3], 0
    %9 = vsyncpa [#allocation4], 0
    // Predicated region
    $region2: #{tpu_custom_call.1} parent=1 // pred_check
      _
    $region3: #{tpu_custom_call.1} parent=1 // pred_check_branch
      %11 = sbr.rel (0) target = $region5
    $region4: #{tpu_custom_call.1} parent=1 // pred_region
      %s13 = ssub.s32 16, 16
      %14 = vsyncadd [#allocation5], %s13
      %17 = dma.hbm_to_smem %s0, 16, [#allocation2], [#allocation5]
    $region5: #{tpu_custom_call.1} parent=1 // pred_fallthru
      _
    // Predicated region
    $region6: #{tpu_custom_call.1} parent=1 // pred_check
      _
    $region7: #{tpu_custom_call.1} parent=1 // pred_check_branch
      %19 = sbr.rel (0) target = $region9
    $region8: #{tpu_custom_call.1} parent=1 // pred_region
      %s21 = ssub.s32 512, 64
      %22 = vsyncadd [#allocation3], %s21
      %s23 = sshll.u32 [#allocation6], 4
      %s24 = int_to_ptr.vmem [resolvable:$true] %s23
      %29 = dma.hbm_to_vmem [thread:$0]  %s1, 64, %s24, [#allocation3], 64, 64, 4
    $region9: #{tpu_custom_call.1} parent=1 // pred_fallthru
      _
    // Predicated region
    $region10: #{tpu_custom_call.1} parent=1 // pred_check
      _
    $region11: #{tpu_custom_call.1} parent=1 // pred_check_branch
      %31 = sbr.rel (0) target = $region13
    $region12: #{tpu_custom_call.1} parent=1 // pred_region
      %32 = dma.done [#allocation5], 16
    $region13: #{tpu_custom_call.1} parent=1 // pred_fallthru
      _
    // Predicated region
    $region14: #{tpu_custom_call.1} parent=1 // pred_check
      _
    $region15: #{tpu_custom_call.1} parent=1 // pred_check_branch
      %34 = sbr.rel (0) target = $region17
    $region16: #{tpu_custom_call.1} parent=1 // pred_region
      %35 = dma.done [#allocation3], 512
    $region17: #{tpu_custom_call.1} parent=1 // pred_fallthru
      _
    %36 = sfence
    %s37 = sld [smem:[#allocation2]]
    %s38 = sld [smem:[#allocation2 + $0x1]]
    %v39 = vld [vmem:[#allocation6] sm:$0xf]
    %v40 = vld [vmem:[#allocation6 + $0x4] sm:$0xf]
    %v41 = vld [vmem:[#allocation6 + $0x8] sm:$0xf]
    %v42 = vld [vmem:[#allocation6 + $0xc] sm:$0xf]
    %v43 = vld [vmem:[#allocation6 + $0x10] sm:$0xf]
    %v44 = vld [vmem:[#allocation6 + $0x14] sm:$0xf]
    %v45 = vld [vmem:[#allocation6 + $0x18] sm:$0xf]
    %v46 = vld [vmem:[#allocation6 + $0x1c] sm:$0xf]
    %v47 = vstv %s37
    %v48 = vmul.f32 %v39, %v47
    %v49 = vmul.f32 %v40, %v47
    %v50 = vmul.f32 %v41, %v47
    %v51 = vmul.f32 %v42, %v47
    %v52 = vmul.f32 %v43, %v47
    %v53 = vmul.f32 %v44, %v47
    %v54 = vmul.f32 %v45, %v47
    %v55 = vmul.f32 %v46, %v47
    %v56 = vstv %s38
    %v57 = vadd.f32 %v48, %v56
    %v58 = vadd.f32 %v49, %v56
    %v59 = vadd.f32 %v50, %v56
    %v60 = vadd.f32 %v51, %v56
    %v61 = vadd.f32 %v52, %v56
    %v62 = vadd.f32 %v53, %v56
    %v63 = vadd.f32 %v54, %v56
    %v64 = vadd.f32 %v55, %v56
    %v65 = vmax.f32 %v57, 0.0
    %v66 = vmax.f32 %v58, 0.0
    %v67 = vmax.f32 %v59, 0.0
    %v68 = vmax.f32 %v60, 0.0
    %v69 = vmax.f32 %v61, 0.0
    %v70 = vmax.f32 %v62, 0.0
    %v71 = vmax.f32 %v63, 0.0
    %v72 = vmax.f32 %v64, 0.0
    %v73 = vlaneseq
    %vm74 = vcmp.ge.s32.totalorder %v73, 0
    %vm75 = vcmp.lt.s32.totalorder %v73, 512
    %vm76 = vmand %vm74, %vm75
    %77 = vst.msk [vmem:[#allocation7] sm:$0xf] %vm76, %v65
    %78 = vst.msk [vmem:[#allocation7 + $0x4] sm:$0xf] %vm76, %v66
    %79 = vst.msk [vmem:[#allocation7 + $0x8] sm:$0xf] %vm76, %v67
    %80 = vst.msk [vmem:[#allocation7 + $0xc] sm:$0xf] %vm76, %v68
    %81 = vst.msk [vmem:[#allocation7 + $0x10] sm:$0xf] %vm76, %v69
    %82 = vst.msk [vmem:[#allocation7 + $0x14] sm:$0xf] %vm76, %v70
    %83 = vst.msk [vmem:[#allocation7 + $0x18] sm:$0xf] %vm76, %v71
    %84 = vst.msk [vmem:[#allocation7 + $0x1c] sm:$0xf] %vm76, %v72
    // Predicated region
    $region18: #{tpu_custom_call.1} parent=1 // pred_check
      _
    $region19: #{tpu_custom_call.1} parent=1 // pred_check_branch
      %86 = sbr.rel (0) target = $region21
    $region20: #{tpu_custom_call.1} parent=1 // pred_region
      %s88 = ssub.s32 512, 64
      %89 = vsyncadd [#allocation4], %s88
      %s90 = sshll.u32 [#allocation7], 4
      %s91 = int_to_ptr.vmem [resolvable:$true] %s90
      %96 = dma.vmem_to_hbm [thread:$0]  %s91, 64, %s2, [#allocation4], 64, 64, 4
    $region21: #{tpu_custom_call.1} parent=1 // pred_fallthru
      _
    // Predicated region
    $region22: #{tpu_custom_call.1} parent=1 // pred_check
      _
    $region23: #{tpu_custom_call.1} parent=1 // pred_check_branch
      %98 = sbr.rel (0) target = $region25
    $region24: #{tpu_custom_call.1} parent=1 // pred_region
      %99 = dma.done [#allocation4], 512
    $region25: #{tpu_custom_call.1} parent=1 // pred_fallthru
      _
    %100 = vsyncpa [#allocation3], 1
    %101 = vsyncpa [#allocation4], 1
    %102 = vsyncpa [#allocation5], 1

</llo_original>
